<compile_context>
chip_gen: v6e
topology: v6e:2x2x1
jax: 0.10.0
libtpu: 0.0.40
codegen_flags: <defaults>
</compile_context>

<pallas_src>
import functools

import jax
import jax.numpy as jnp
from jax import lax
from jax.experimental import pallas as pl
from jax.experimental.pallas import tpu as pltpu


# ----------------------------------------------------------------------------
# helpers
# ----------------------------------------------------------------------------
def _round_up(x, m):
    return (x + m - 1) // m * m


# Conservative per-call VMEM budget for the batch-tiled buffers: fits v5e's
# 16 MiB default scoped limit; far under v6e/v7x (32 MiB scoped defaults).
_VMEM_TILE_BUDGET = 12 * 1024 * 1024
_VMEM_LIMIT_BYTES = 32 * 1024 * 1024   # >= every generation's scoped default,
                                       # <= every generation's physical VMEM


def _pick_tile_b(b, lanes):
    # Per batch row in VMEM: double-buffered x + eps + out blocks, each padded
    # to a (., 128) f32 lane tile.
    bytes_per_row = 2 * 4 * (128 + 128 + lanes)
    cap = max(8, (_VMEM_TILE_BUDGET // bytes_per_row) // 8 * 8)
    tile = min(cap, _round_up(b, 8))
    if b >= 16:
        # Guarantee >= 2 grid steps so v7x's two TensorCores both get work
        # (one extra ~0.35us step is noise on v5e/v6e).
        tile = min(tile, _round_up(pl.cdiv(b, 2), 8))
    return tile


def make_dims(input_dim, latent_dim):
    c1, c2 = 2 * input_dim, 4 * input_dim
    n1 = 2 * c1                 # conv_input output: 2 positions x C1 channels
    n2 = 3 * c2                 # conv_hidden output: 3 positions x C2 channels
    lanes = max(128, _round_up(max(n1, n2, 4 * latent_dim), 128))
    d = dict(C_IN=input_dim, C1=c1, C2=c2, L=latent_dim,
             N1=n1, N2=n2, LANES=lanes)
    d["R_W1"] = 0                       # rows [0, LANES): W1 (contraction-padded)
    d["R_W2"] = lanes                   # rows [LANES, 2*LANES): W2
    d["R_WH"] = 2 * lanes               # rows [2*LANES, 3*LANES): fused head
    d["R_B"] = 3 * lanes                # 3 bias rows (each full-lane-width)
    d["ROWS"] = _round_up(3 * lanes + 3, 8)
    return d


# ----------------------------------------------------------------------------
# parameter packing (torch-layout params -> one lane-dense VMEM slab)
# ----------------------------------------------------------------------------
def pack_params(p, d):
    cin, c2, L = d["C_IN"], d["C2"], d["L"]
    n1, n2, lanes = d["N1"], d["N2"], d["LANES"]

    w1, b1 = p["conv1_w"], p["conv1_b"]            # (C1, Cin, 2), (C1,)
    w2, b2 = p["conv2_w"], p["conv2_b"]            # (C2, C1, 2), (C2,)
    wm, bm = p["fc_mean_w"], p["fc_mean_b"]        # (L, 3*C2), (L,)
    wlv, blv = p["fc_logvar_w"], p["fc_logvar_b"]

    # conv_input as one matmul: output lanes = [pos0 chans | pos1 chans]
    w1cat = jnp.concatenate([w1[:, :, 1].T, w1[:, :, 0].T], axis=1)   # (Cin, N1)
    b1cat = jnp.concatenate([b1, b1])

    # conv_hidden as one matmul on [r(pos0) | r(pos1)]
    wk0, wk1 = w2[:, :, 0].T, w2[:, :, 1].T        # (C1, C2)
    zero = jnp.zeros_like(wk0)
    w2big = jnp.concatenate(
        [jnp.concatenate([wk1, wk0, zero], axis=1),     # r0 -> pos0, pos1
         jnp.concatenate([zero, wk1, wk0], axis=1)],    # r1 -> pos1, pos2
        axis=0)                                          # (N1, N2)
    b2cat = jnp.concatenate([b2, b2, b2])

    # fused head; re-order rows from torch's flatten order (c*3 + t) to the
    # kernel's position-major (t*C2 + c) layout.
    def reorder(w):                                 # (L, N2) -> (N2, L)
        return w.T.reshape(c2, 3, L).transpose(1, 0, 2).reshape(n2, L)

    wm_r, wlv_r = reorder(wm), reorder(wlv)
    # head columns [mean | mean | log_var | log_var] == output slab layout
    wheads = jnp.concatenate([wm_r, wm_r, wlv_r, wlv_r], axis=1)      # (N2, 4L)
    bheads = jnp.concatenate([bm, bm, blv, blv])

    slab = jnp.zeros((d["ROWS"], lanes), jnp.float32)
    slab = slab.at[0:cin, 0:n1].set(w1cat)
    slab = slab.at[d["R_W2"]:d["R_W2"] + n1, 0:n2].set(w2big)
    slab = slab.at[d["R_WH"]:d["R_WH"] + n2, 0:4 * L].set(wheads)
    slab = slab.at[d["R_B"] + 0, 0:n1].set(b1cat)
    slab = slab.at[d["R_B"] + 1, 0:n2].set(b2cat)
    slab = slab.at[d["R_B"] + 2, 0:4 * L].set(bheads)
    return slab


# ----------------------------------------------------------------------------
# kernel
# ----------------------------------------------------------------------------
def _encoder_kernel(x_ref, eps_ref, p_ref, out_ref, *, dims):
    d = dims
    C_IN, L, LANES = d["C_IN"], d["L"], d["LANES"]
    R_W2, R_WH, R_B = d["R_W2"], d["R_WH"], d["R_B"]

    x = x_ref[...]                                          # (TB, C_IN)
    eps = eps_ref[...]                                      # (TB, L)
    tb = x.shape[0]

    # lane-dense activations: zero-pad x to the full 128-lane contraction width
    xp = jnp.concatenate(
        [x, jnp.zeros((tb, LANES - C_IN), jnp.float32)], axis=-1)      # (TB, LANES)

    # static, sublane-aligned slices of the single packed param slab
    w1 = p_ref[0:LANES, :]                                  # (LANES, LANES)
    w2 = p_ref[R_W2:R_W2 + LANES, :]
    wh = p_ref[R_WH:R_WH + LANES, :]
    b1 = p_ref[R_B + 0:R_B + 1, :]                          # (1, LANES)
    b2 = p_ref[R_B + 1:R_B + 2, :]
    bh = p_ref[R_B + 2:R_B + 3, :]

    # conv_input (+relu), conv_hidden (+tanh), fused [mean|mean|log_var|log_var]
    # head — all operands stay 128-lane dense (zero weight rows/cols are exact:
    # relu(0)=0, tanh(0)=0).
    h1 = jnp.maximum(jnp.dot(xp, w1, preferred_element_type=jnp.float32) + b1, 0.0)
    h2 = jnp.tanh(jnp.dot(h1, w2, preferred_element_type=jnp.float32) + b2)
    heads = jnp.dot(h2, wh, preferred_element_type=jnp.float32) + bh   # (TB, LANES)

    # heads lanes: [mean | mean | log_var | log_var | 0...]
    std_lanes = jnp.exp(0.5 * heads)                        # EUP, full width
    col = lax.broadcasted_iota(jnp.int32, heads.shape, 1)
    out = jnp.where((col >= 2 * L) & (col < 3 * L), std_lanes, heads)
    out_ref[...] = out                                      # one unmasked 128-wide store
    # fix z lanes: z = mean + eps * std   (std = exp(0.5*log_var))
    out_ref[:, 0:L] = heads[:, 0:L] + eps * std_lanes[:, 2 * L:3 * L]


# ----------------------------------------------------------------------------
# wrapper
# ----------------------------------------------------------------------------
def encoder_conv_forward(x, eps, slab, dims):
    d = dims
    B = x.shape[0]
    L, C_IN, LANES, ROWS = d["L"], d["C_IN"], d["LANES"], d["ROWS"]

    x = x.astype(jnp.float32)
    eps = eps.astype(jnp.float32)

    tile_b = _pick_tile_b(B, LANES)
    b_pad = pl.cdiv(B, tile_b) * tile_b
    if b_pad != B:
        x = jnp.pad(x, ((0, b_pad - B), (0, 0)))
        eps = jnp.pad(eps, ((0, b_pad - B), (0, 0)))
    grid = (b_pad // tile_b,)

    cost = pl.CostEstimate(
        flops=2 * b_pad * (C_IN * d["N1"] + d["N1"] * d["N2"] + d["N2"] * 4 * L),
        transcendentals=2 * b_pad * LANES,
        bytes_accessed=4 * (b_pad * (C_IN + L + LANES) + ROWS * LANES),
    )

    kernel = functools.partial(_encoder_kernel, dims=d)
    out_slab = pl.pallas_call(
        kernel,
        out_shape=jax.ShapeDtypeStruct((b_pad, LANES), jnp.float32),
        grid_spec=pltpu.PrefetchScalarGridSpec(
            num_scalar_prefetch=0,
            grid=grid,
            in_specs=[
                pl.BlockSpec((tile_b, C_IN), lambda i: (i, 0)),   # x: own tiny DMA
                pl.BlockSpec((tile_b, L), lambda i: (i, 0)),      # eps: own tiny DMA
                # Weight slab: constant index_map -> DMA'd once and resident.
                # (kept default-buffered: the ~200 KiB second buffer is noise
                # and avoids any pipeline_mode compatibility risk.)
                pl.BlockSpec((ROWS, LANES), lambda i: (0, 0)),
            ],
            out_specs=pl.BlockSpec((tile_b, LANES), lambda i: (i, 0)),
        ),
        compiler_params=pltpu.CompilerParams(
            dimension_semantics=("parallel",),        # v7x: shard batch over 2 TCs
            vmem_limit_bytes=_VMEM_LIMIT_BYTES),
        cost_estimate=cost,
    )(x, eps, slab)

    # One contiguous gather of the valid lanes, then cheap lazy splits.
    out4 = out_slab[:B, 0:4 * L]
    z = out4[:, 0:L]
    mean = out4[:, L:2 * L]
    var = out4[:, 2 * L:3 * L]          # == std-dev, matching the torch naming
    log_var = out4[:, 3 * L:4 * L]
    return z, mean, var, log_var


# ----------------------------------------------------------------------------
# params + pure-JAX reference (independent Conv1d implementation)
# ----------------------------------------------------------------------------
def make_params(key, input_dim, latent_dim):
    c1, c2 = 2 * input_dim, 4 * input_dim
    hflat = c2 * 3
    ks = jax.random.split(key, 8)

    def u(k, shape, fan_in):
        bound = 1.0 / (fan_in ** 0.5)
        return jax.random.uniform(k, shape, jnp.float32, -bound, bound)

    return dict(
        conv1_w=u(ks[0], (c1, input_dim, 2), input_dim * 2),
        conv1_b=u(ks[1], (c1,), input_dim * 2),
        conv2_w=u(ks[2], (c2, c1, 2), c1 * 2),
        conv2_b=u(ks[3], (c2,), c1 * 2),
        fc_mean_w=u(ks[4], (latent_dim, hflat), hflat),
        fc_mean_b=u(ks[5], (latent_dim,), hflat),
        fc_logvar_w=u(ks[6], (latent_dim, hflat), hflat),
        fc_logvar_b=u(ks[7], (latent_dim,), hflat),
    )


def _conv1d_ref(x, w, b, padding=1):
    # x: (B, Cin, Lx); w: (Cout, Cin, K); torch Conv1d semantics.
    _, _, lx = x.shape
    k = w.shape[2]
    xp = jnp.pad(x, ((0, 0), (0, 0), (padding, padding)))
    lo = lx + 2 * padding - k + 1
    out = jnp.zeros((x.shape[0], w.shape[0], lo), x.dtype)
    for kk in range(k):
        out = out + jnp.einsum("bil,oi->bol", xp[:, :, kk:kk + lo], w[:, :, kk])
    return out + b[None, :, None]


def encoder_conv_ref(x, eps, p):
    b = x.shape[0]
    xi = x[:, :, None]
    y = jnp.maximum(_conv1d_ref(xi, p["conv1_w"], p["conv1_b"]), 0.0)
    h = jnp.tanh(_conv1d_ref(y, p["conv2_w"], p["conv2_b"]))
    hf = h.reshape(b, -1)
    mean = hf @ p["fc_mean_w"].T + p["fc_mean_b"]
    log_var = hf @ p["fc_logvar_w"].T + p["fc_logvar_b"]
    var = jnp.exp(0.5 * log_var)
    z = mean + eps * var
    return z, mean, var, log_var


# ----------------------------------------------------------------------------
if __name__ == "__main__":
    # Module defaults: input_dim=4, latent_dim=1; small batch (16 -> 2-step grid).
    B, INPUT_DIM, LATENT_DIM = 16, 4, 1

    root = jax.random.PRNGKey(0)
    k_x, k_eps, k_p = jax.random.split(root, 3)

    x = jax.random.normal(k_x, (B, INPUT_DIM), jnp.float32)
    # TODO(synk): torch.randn_like(var) is replaced by an explicit eps input so
    # the kernel is deterministic and checkable (pltpu.prng_* could generate it
    # in-kernel, but never bit-identically to torch).
    eps = jax.random.normal(k_eps, (B, LATENT_DIM), jnp.float32)
    params = make_params(k_p, INPUT_DIM, LATENT_DIM)

    dims = make_dims(INPUT_DIM, LATENT_DIM)
    slab = pack_params(params, dims)

    outs = encoder_conv_forward(x, eps, slab, dims)
    outs = jax.block_until_ready(outs)

    refs = encoder_conv_ref(x, eps, params)
    for name, got, want in zip(("z", "mean", "var", "log_var"), outs, refs):
        assert got.shape == want.shape and got.dtype == want.dtype, name
        assert jnp.allclose(got, want, atol=1e-4, rtol=1e-4), f"{name} mismatch"

    print("KERNEL_OK")
</pallas_src>

<mosaic_0001>
module attributes {stable_mosaic.version = 11 : i64} {
  func.func @_encoder_kernel(%arg0: i32, %arg1: memref<8x4xf32, #tpu.memory_space<vmem>>, %arg2: memref<8x1xf32, #tpu.memory_space<vmem>>, %arg3: memref<392x128xf32, #tpu.memory_space<vmem>>, %arg4: memref<8x128xf32, #tpu.memory_space<vmem>>) attributes {dimension_semantics = [#tpu.dimension_semantics<parallel>], iteration_bounds = array<i64: 2>, scalar_prefetch = 0 : i64, scratch_operands = 0 : i64, tpu.core_type = #tpu.core_type<tc>, window_params = [{transform_indices = @transform_0, window_bounds = array<i64: 8, 4>}, {transform_indices = @transform_1, window_bounds = array<i64: 8, 1>}, {pipeline_mode = #tpu.pipeline_mode<synchronous>, transform_indices = @transform_2, window_bounds = array<i64: 392, 128>}, {transform_indices = @transform_3, window_bounds = array<i64: 8, 128>}]} {
    %c0 = arith.constant 0 : index
    %c0_0 = arith.constant 0 : index
    %0 = vector.load %arg1[%c0, %c0_0] : memref<8x4xf32, #tpu.memory_space<vmem>>, vector<8x4xf32>
    %c0_1 = arith.constant 0 : index
    %c0_2 = arith.constant 0 : index
    %1 = vector.load %arg2[%c0_1, %c0_2] : memref<8x1xf32, #tpu.memory_space<vmem>>, vector<8x1xf32>
    %cst = arith.constant 0.000000e+00 : f32
    %2 = vector.broadcast %cst : f32 to vector<8x124xf32>
    %3 = tpu.concatenate %0, %2 in 1 : vector<8x4xf32>, vector<8x124xf32> -> vector<8x128xf32>
    %c0_3 = arith.constant 0 : index
    %c0_4 = arith.constant 0 : index
    %4 = vector.load %arg3[%c0_3, %c0_4] : memref<392x128xf32, #tpu.memory_space<vmem>>, vector<128x128xf32>
    %c128 = arith.constant 128 : index
    %c0_5 = arith.constant 0 : index
    %5 = vector.load %arg3[%c128, %c0_5] : memref<392x128xf32, #tpu.memory_space<vmem>>, vector<128x128xf32>
    %c256 = arith.constant 256 : index
    %c0_6 = arith.constant 0 : index
    %6 = vector.load %arg3[%c256, %c0_6] : memref<392x128xf32, #tpu.memory_space<vmem>>, vector<128x128xf32>
    %c384 = arith.constant 384 : index
    %c0_7 = arith.constant 0 : index
    %7 = vector.load %arg3[%c384, %c0_7] : memref<392x128xf32, #tpu.memory_space<vmem>>, vector<1x128xf32>
    %c385 = arith.constant 385 : index
    %c0_8 = arith.constant 0 : index
    %8 = vector.load %arg3[%c385, %c0_8] : memref<392x128xf32, #tpu.memory_space<vmem>>, vector<1x128xf32>
    %c386 = arith.constant 386 : index
    %c0_9 = arith.constant 0 : index
    %9 = vector.load %arg3[%c386, %c0_9] : memref<392x128xf32, #tpu.memory_space<vmem>>, vector<1x128xf32>
    %cst_10 = arith.constant dense<0.000000e+00> : vector<8x128xf32>
    %10 = tpu.matmul %3, %4, %cst_10 {dimension_numbers = #tpu.dot_dimension_numbers<[1], [0], [0], [1], [0, 0, 1, 1], [], []>} : vector<8x128xf32>, vector<128x128xf32>, vector<8x128xf32> -> vector<8x128xf32>
    %11 = vector.broadcast %7 : vector<1x128xf32> to vector<8x128xf32>
    %12 = arith.addf %10, %11 : vector<8x128xf32>
    %cst_11 = arith.constant 0.000000e+00 : f32
    %13 = vector.broadcast %cst_11 : f32 to vector<8x128xf32>
    %14 = arith.maximumf %12, %13 : vector<8x128xf32>
    %cst_12 = arith.constant dense<0.000000e+00> : vector<8x128xf32>
    %15 = tpu.matmul %14, %5, %cst_12 {dimension_numbers = #tpu.dot_dimension_numbers<[1], [0], [0], [1], [0, 0, 1, 1], [], []>} : vector<8x128xf32>, vector<128x128xf32>, vector<8x128xf32> -> vector<8x128xf32>
    %16 = vector.broadcast %8 : vector<1x128xf32> to vector<8x128xf32>
    %17 = arith.addf %15, %16 : vector<8x128xf32>
    %18 = math.tanh %17 : vector<8x128xf32>
    %cst_13 = arith.constant dense<0.000000e+00> : vector<8x128xf32>
    %19 = tpu.matmul %18, %6, %cst_13 {dimension_numbers = #tpu.dot_dimension_numbers<[1], [0], [0], [1], [0, 0, 1, 1], [], []>} : vector<8x128xf32>, vector<128x128xf32>, vector<8x128xf32> -> vector<8x128xf32>
    %20 = vector.broadcast %9 : vector<1x128xf32> to vector<8x128xf32>
    %21 = arith.addf %19, %20 : vector<8x128xf32>
    %cst_14 = arith.constant 5.000000e-01 : f32
    %22 = vector.broadcast %cst_14 : f32 to vector<8x128xf32>
    %23 = arith.mulf %22, %21 : vector<8x128xf32>
    %24 = math.exp %23 : vector<8x128xf32>
    %25 = tpu.iota {dimensions = array<i32: 1>} : vector<8x128xi32>
    %c2_i32 = arith.constant 2 : i32
    %26 = vector.broadcast %c2_i32 : i32 to vector<8x128xi32>
    %27 = arith.cmpi sge, %25, %26 : vector<8x128xi32>
    %c3_i32 = arith.constant 3 : i32
    %28 = vector.broadcast %c3_i32 : i32 to vector<8x128xi32>
    %29 = arith.cmpi slt, %25, %28 : vector<8x128xi32>
    %30 = arith.andi %27, %29 : vector<8x128xi1>
    %31 = arith.select %30, %24, %21 : vector<8x128xi1>, vector<8x128xf32>
    %c0_15 = arith.constant 0 : index
    %c0_16 = arith.constant 0 : index
    %32 = vector.load %arg4[%c0_15, %c0_16] : memref<8x128xf32, #tpu.memory_space<vmem>>, vector<8x128xf32>
    tpu.vector_store %arg4[%c0_15, %c0_16], %31 {strides = array<i32>} : memref<8x128xf32, #tpu.memory_space<vmem>>, vector<8x128xf32>,
    %33 = vector.extract_strided_slice %21 {offsets = [0, 0], sizes = [8, 1], strides = [1, 1]} : vector<8x128xf32> to vector<8x1xf32>
    %34 = vector.extract_strided_slice %24 {offsets = [0, 2], sizes = [8, 1], strides = [1, 1]} : vector<8x128xf32> to vector<8x1xf32>
    %35 = arith.mulf %1, %34 : vector<8x1xf32>
    %36 = arith.addf %33, %35 : vector<8x1xf32>
    %c0_17 = arith.constant 0 : index
    %c0_18 = arith.constant 0 : index
    %37 = vector.load %arg4[%c0_17, %c0_18] : memref<8x128xf32, #tpu.memory_space<vmem>>, vector<8x1xf32>
    tpu.vector_store %arg4[%c0_17, %c0_18], %36 {strides = array<i32>} : memref<8x128xf32, #tpu.memory_space<vmem>>, vector<8x1xf32>,
    return
  }
  func.func @transform_0(%arg0: i32) -> (i32, i32) {
    %c0_i32 = arith.constant 0 : i32
    %c0_i32_0 = arith.constant 0 : i32
    return %arg0, %c0_i32 : i32, i32
  }
  func.func @transform_1(%arg0: i32) -> (i32, i32) {
    %c0_i32 = arith.constant 0 : i32
    %c0_i32_0 = arith.constant 0 : i32
    return %arg0, %c0_i32 : i32, i32
  }
  func.func @transform_2(%arg0: i32) -> (i32, i32) {
    %c0_i32 = arith.constant 0 : i32
    %c0_i32_0 = arith.constant 0 : i32
    %c0_i32_1 = arith.constant 0 : i32
    return %c0_i32, %c0_i32_0 : i32, i32
  }
  func.func @transform_3(%arg0: i32) -> (i32, i32) {
    %c0_i32 = arith.constant 0 : i32
    %c0_i32_0 = arith.constant 0 : i32
    return %arg0, %c0_i32 : i32, i32
  }
}

</mosaic_0001>

<llo_original>
// kernel: tpu_custom_call.1
$region0: #{tpu_custom_call.1}
  #allocation0 [shape = 'u32[]', space=smem, size = 0x4, offset = 0x4, fixed_abs, tag = 'smem constant byte address 0x4 - core index']
  #allocation1 [shape = 'u32[144,128]{1,0:T(1,128)}', space=vmem, size = 0x12000, scoped, tag = 'internal scratch']
  %s0 = inlined_call_operand.vmem [shape: f32[16,4], index: 0, kind: input, shape index: {}]
  %s1 = inlined_call_operand.vmem [shape: f32[16,1], index: 1, kind: input, shape index: {}]
  %s2 = inlined_call_operand.hbm [shape: f32[392,128], index: 2, kind: input, shape index: {}]
  %s3 = inlined_call_operand.hbm [shape: f32[16,128], index: 3, kind: output, shape index: {}]
  %s4 = sld [smem:[#allocation0]]
  $region49: #{tpu_custom_call.1} parent=0
    _
  %s6 = ssub.s32 1, %s4
  %s7 = scalar_select 0, %s6, %s4
  $region1: #{tpu_custom_call.1} parent=0
    #allocation2 [shape = 'u8[200704]{0}', space=vmem, size = 0x31000, scoped, tag = 'input window, operand 2, single buffered']
    #allocation3 [shape = 's32[2]{0}', space=sflag, size = 0x8, scoped, tag = 'scoped memory for tpu_custom_call.1']
    #allocation4 [shape = 's32[2]{0}', space=sflag, size = 0x8, scoped, tag = 'scoped memory for tpu_custom_call.1']
    #allocation5 [shape = 'u8[8192]{0}', space=vmem, size = 0x2000, scoped, tag = 'output window, operand 0']
    %8 = vsyncpa [#allocation3], 0
    %9 = vsyncpa [#allocation4], 0
    %s10 = scalar_lea.sflag [#allocation4], 1
    %11 = vsyncpa %s10, 0
    loop: start=0, step=1, limit=4
    $region2: #{tpu_custom_call.1} parent=1 // loop_pre_header
      _
    $region3: #{tpu_custom_call.1} parent=1 // loop_header
      %s13 = sphi 0, %s17
      %p14 = scmp.ge.s32.totalorder %s13, 4
      %s23 = sphi 0, %s25
      %s26 = sphi 0, %s23
      %s27 = sphi 0, %s26
      %s43 = sphi 0, %s27
      %s49 = sphi 0, %s51
      %s52 = sphi 0, %s49
      %s53 = sphi 0, %s52
      %s69 = sphi 0, %s53
      %s73 = sphi 0, %s73
      %s75 = sphi 0, %s73
      %s76 = sphi 0, %s75
      %s90 = sphi 0, %s76
      %s96 = sphi 0, %s98
      %s99 = sphi 0, %s96
      %s100 = sphi 0, %s99
      %s116 = sphi 0, %s100
    $region4: #{tpu_custom_call.1} parent=1 // loop_header_branch
      %16 = sbr.rel (%p14) target = $region8
    $region5: #{tpu_custom_call.1} parent=1 // loop_body
      %s18 = ssub.s32 %s13, 1
      %s19 = ssub.s32 %s13, 2
      %s20 = sadd.s32 %s13, 1
      %s21 = ssub.s32 %s13, %s20
      %p22 = scmp.eq.s32.totalorder %s21, 0
      %s24 = sadd.s32 %s23, 1
      %s25 = scalar_select %p22, %s23, %s24
      %p28 = pneg %p22
      %p29 = scmp.eq.s32.totalorder %s13, 1
      %p30 = por %p28, %p29
      %p31 = scmp.ne.s32.totalorder %s23, %s26
      %p32 = scmp.eq.s32.totalorder %s13, 0
      %p33 = por %p31, %p32
      %p34 = scmp.ne.s32.totalorder %s23, %s26
      %p35 = scmp.eq.s32.totalorder %s18, 1
      %p36 = por %p34, %p35
      %p37 = scmp.ne.s32.totalorder %s26, %s27
      %p38 = scmp.eq.s32.totalorder %s18, 0
      %p39 = por %p37, %p38
      %p40 = scmp.ne.s32.totalorder %s26, %s27
      %p41 = scmp.eq.s32.totalorder %s19, 1
      %p42 = por %p40, %p41
      %p44 = scmp.ne.s32.totalorder %s27, %s43
      %p45 = scmp.eq.s32.totalorder %s19, 0
      %p46 = por %p44, %p45
      %s47 = ssub.s32 %s13, %s20
      %p48 = scmp.eq.s32.totalorder %s47, 0
      %s50 = sadd.s32 %s49, 1
      %s51 = scalar_select %p48, %s49, %s50
      %p54 = pneg %p48
      %p55 = scmp.eq.s32.totalorder %s13, 1
      %p56 = por %p54, %p55
      %p57 = scmp.ne.s32.totalorder %s49, %s52
      %p58 = scmp.eq.s32.totalorder %s13, 0
      %p59 = por %p57, %p58
      %p60 = scmp.ne.s32.totalorder %s49, %s52
      %p61 = scmp.eq.s32.totalorder %s18, 1
      %p62 = por %p60, %p61
      %p63 = scmp.ne.s32.totalorder %s52, %s53
      %p64 = scmp.eq.s32.totalorder %s18, 0
      %p65 = por %p63, %p64
      %p66 = scmp.ne.s32.totalorder %s52, %s53
      %p67 = scmp.eq.s32.totalorder %s19, 1
      %p68 = por %p66, %p67
      %p70 = scmp.ne.s32.totalorder %s53, %s69
      %p71 = scmp.eq.s32.totalorder %s19, 0
      %p72 = por %p70, %p71
      %s74 = sadd.s32 %s73, 1
      %p77 = scmp.eq.s32.totalorder %s13, 1
      %p78 = scmp.ne.s32.totalorder %s73, %s75
      %p79 = scmp.eq.s32.totalorder %s13, 0
      %p80 = por %p78, %p79
      %p81 = scmp.ne.s32.totalorder %s73, %s75
      %p82 = scmp.eq.s32.totalorder %s18, 1
      %p83 = por %p81, %p82
      %p84 = scmp.ne.s32.totalorder %s75, %s76
      %p85 = scmp.eq.s32.totalorder %s18, 0
      %p86 = por %p84, %p85
      %p87 = scmp.ne.s32.totalorder %s75, %s76
      %p88 = scmp.eq.s32.totalorder %s19, 1
      %p89 = por %p87, %p88
      %p91 = scmp.ne.s32.totalorder %s76, %s90
      %p92 = scmp.eq.s32.totalorder %s19, 0
      %p93 = por %p91, %p92
      %s94 = ssub.s32 %s13, %s20
      %p95 = scmp.eq.s32.totalorder %s94, 0
      %s97 = sadd.s32 %s96, 1
      %s98 = scalar_select %p95, %s96, %s97
      %p101 = pneg %p95
      %p102 = scmp.eq.s32.totalorder %s13, 1
      %p103 = por %p101, %p102
      %p104 = scmp.ne.s32.totalorder %s96, %s99
      %p105 = scmp.eq.s32.totalorder %s13, 0
      %p106 = por %p104, %p105
      %p107 = scmp.ne.s32.totalorder %s96, %s99
      %p108 = scmp.eq.s32.totalorder %s18, 1
      %p109 = por %p107, %p108
      %p110 = scmp.ne.s32.totalorder %s99, %s100
      %p111 = scmp.eq.s32.totalorder %s18, 0
      %p112 = por %p110, %p111
      %p113 = scmp.ne.s32.totalorder %s99, %s100
      %p114 = scmp.eq.s32.totalorder %s19, 1
      %p115 = por %p113, %p114
      %p117 = scmp.ne.s32.totalorder %s100, %s116
      %p118 = scmp.eq.s32.totalorder %s19, 0
      %p119 = por %p117, %p118
      %p120 = scmp.le.s32.totalorder 1, %s13
      %p121 = scmp.lt.s32.totalorder %s13, 3
      %p122 = pnand %p120, %p121
      %p123 = pneg %p122
      // Predicated region
      $region9: #{tpu_custom_call.1} parent=5 // pred_check
        _
      $region10: #{tpu_custom_call.1} parent=5 // pred_check_branch
        %125 = sbr.rel (%p122) target = $region12
      $region11: #{tpu_custom_call.1} parent=5 // pred_region
        %s126 = ssub.s32 %s13, 1
        // Predicated region
        $region13: #{tpu_custom_call.1} parent=11 // pred_check
          %p127 = pneg %p86
        $region14: #{tpu_custom_call.1} parent=11 // pred_check_branch
          %129 = sbr.rel (%p127) target = $region16
        $region15: #{tpu_custom_call.1} parent=11 // pred_region
          %s131 = ssub.s32 6272, 6272
          %132 = vsyncadd [#allocation3], %s131
          %s133 = sshll.u32 [#allocation2], 4
          %s134 = int_to_ptr.vmem [resolvable:$true] %s133
          %139 = dma.hbm_to_vmem [thread:$0]  %s2, 6272, %s134, [#allocation3], 128, 128, 8
        $region16: #{tpu_custom_call.1} parent=11 // pred_fallthru
          _
      $region12: #{tpu_custom_call.1} parent=5 // pred_fallthru
        _
      %p140 = scmp.lt.s32.totalorder %s13, 2
      // Predicated region
      $region17: #{tpu_custom_call.1} parent=5 // pred_check
        %p141 = pneg %p140
      $region18: #{tpu_custom_call.1} parent=5 // pred_check_branch
        %143 = sbr.rel (%p141) target = $region20
      $region19: #{tpu_custom_call.1} parent=5 // pred_region
        // Predicated region
        $region21: #{tpu_custom_call.1} parent=19 // pred_check
          %p144 = pneg %p33
        $region22: #{tpu_custom_call.1} parent=19 // pred_check_branch
          %146 = sbr.rel (%p144) target = $region24
        $region23: #{tpu_custom_call.1} parent=19 // pred_region
          %p147 = scmp.lt.s32.totalorder %s13, 1
          %s148 = scalar_select %p147, %s13, 1
          %s149 = smul.addr %s148, 8
          %s150 = scalar_lea.vmem %s0, %s149
        $region24: #{tpu_custom_call.1} parent=19 // pred_fallthru
          _
        // Predicated region
        $region25: #{tpu_custom_call.1} parent=19 // pred_check
          %p151 = pneg %p59
        $region26: #{tpu_custom_call.1} parent=19 // pred_check_branch
          %153 = sbr.rel (%p151) target = $region28
        $region27: #{tpu_custom_call.1} parent=19 // pred_region
          %p154 = scmp.lt.s32.totalorder %s13, 1
          %s155 = scalar_select %p154, %s13, 1
          %s156 = smul.addr %s155, 8
          %s157 = scalar_lea.vmem %s1, %s156
        $region28: #{tpu_custom_call.1} parent=19 // pred_fallthru
          _
      $region20: #{tpu_custom_call.1} parent=5 // pred_fallthru
        _
      %p158 = scmp.le.s32.totalorder 1, %s13
      %p159 = scmp.lt.s32.totalorder %s13, 3
      %p160 = pnand %p158, %p159
      %p161 = pneg %p160
      // Predicated region
      $region29: #{tpu_custom_call.1} parent=5 // pred_check
        _
      $region30: #{tpu_custom_call.1} parent=5 // pred_check_branch
        %163 = sbr.rel (%p160) target = $region32
      $region31: #{tpu_custom_call.1} parent=5 // pred_region
        %s164 = ssub.s32 %s13, 1
        // Predicated region
        $region33: #{tpu_custom_call.1} parent=31 // pred_check
          %p165 = pneg %p86
        $region34: #{tpu_custom_call.1} parent=31 // pred_check_branch
          %167 = sbr.rel (%p165) target = $region36
        $region35: #{tpu_custom_call.1} parent=31 // pred_region
          %168 = dma.done [#allocation3], 6272
        $region36: #{tpu_custom_call.1} parent=31 // pred_fallthru
          _
        %p169 = scmp.lt.s32.totalorder %s18, 1
        %s170 = scalar_select %p169, %s18, 1
        %s171 = smul.addr %s170, 8
        %s172 = scalar_lea.vmem %s0, %s171
        %p173 = pneg %p39
        %p174 = pneg %p36
        %p175 = scmp.lt.s32.totalorder %s18, 1
        %s176 = scalar_select %p175, %s18, 1
        %s177 = smul.addr %s176, 8
        %s178 = scalar_lea.vmem %s1, %s177
        %p179 = pneg %p65
        %p180 = pneg %p62
        %p181 = pneg %p86
        %p182 = pneg %p83
        %p183 = pneg %p112
        %p184 = pneg %p109
        %s185 = sand.u32 %s99, 1
        %s186 = scalar_lea.sflag [#allocation4], %s185
        %s187 = sand.u32 %s99, 1
        %s188 = smul.addr %s187, 8
        %s189 = scalar_lea.vmem [#allocation5], %s188
        %p190 = scmp.lt.s32.totalorder %s18, 1
        %s191 = scalar_select %p190, %s18, 1
        %s192 = smul.addr %s191, 8
        %s193 = scalar_lea.vmem %s0, %s192
        %p194 = scmp.lt.s32.totalorder %s18, 1
        %s195 = scalar_select %p194, %s18, 1
        %s196 = smul.addr %s195, 8
        %s197 = scalar_lea.vmem %s1, %s196
        %v198 = vld [vmem:[%s193] sm:$0xff]
        %v199 = vld [vmem:[%s197] sm:$0xff]
        %vm200 = vcmask 31744
        %v201 = vsel %vm200, %v198, 0.0
        %v202 = vld [vmem:[#allocation2] sm:$0xff]
        %v203 = vld [vmem:[#allocation2 + $0x8] sm:$0xff]
        %v204 = vld [vmem:[#allocation2 + $0x10] sm:$0xff]
        %v205 = vld [vmem:[#allocation2 + $0x18] sm:$0xff]
        %v206 = vld [vmem:[#allocation2 + $0x20] sm:$0xff]
        %v207 = vld [vmem:[#allocation2 + $0x28] sm:$0xff]
        %v208 = vld [vmem:[#allocation2 + $0x30] sm:$0xff]
        %v209 = vld [vmem:[#allocation2 + $0x38] sm:$0xff]
        %v210 = vld [vmem:[#allocation2 + $0x40] sm:$0xff]
        %v211 = vld [vmem:[#allocation2 + $0x48] sm:$0xff]
        %v212 = vld [vmem:[#allocation2 + $0x50] sm:$0xff]
        %v213 = vld [vmem:[#allocation2 + $0x58] sm:$0xff]
        %v214 = vld [vmem:[#allocation2 + $0x60] sm:$0xff]
        %v215 = vld [vmem:[#allocation2 + $0x68] sm:$0xff]
        %v216 = vld [vmem:[#allocation2 + $0x70] sm:$0xff]
        %v217 = vld [vmem:[#allocation2 + $0x78] sm:$0xff]
        %v218 = vld [vmem:[#allocation2 + $0x80] sm:$0xff]
        %v219 = vld [vmem:[#allocation2 + $0x88] sm:$0xff]
        %v220 = vld [vmem:[#allocation2 + $0x90] sm:$0xff]
        %v221 = vld [vmem:[#allocation2 + $0x98] sm:$0xff]
        %v222 = vld [vmem:[#allocation2 + $0xa0] sm:$0xff]
        %v223 = vld [vmem:[#allocation2 + $0xa8] sm:$0xff]
        %v224 = vld [vmem:[#allocation2 + $0xb0] sm:$0xff]
        %v225 = vld [vmem:[#allocation2 + $0xb8] sm:$0xff]
        %v226 = vld [vmem:[#allocation2 + $0xc0] sm:$0xff]
        %v227 = vld [vmem:[#allocation2 + $0xc8] sm:$0xff]
        %v228 = vld [vmem:[#allocation2 + $0xd0] sm:$0xff]
        %v229 = vld [vmem:[#allocation2 + $0xd8] sm:$0xff]
        %v230 = vld [vmem:[#allocation2 + $0xe0] sm:$0xff]
        %v231 = vld [vmem:[#allocation2 + $0xe8] sm:$0xff]
        %v232 = vld [vmem:[#allocation2 + $0xf0] sm:$0xff]
        %v233 = vld [vmem:[#allocation2 + $0xf8] sm:$0xff]
        %v234 = vld [vmem:[#allocation2 + $0x100] sm:$0xff]
        %v235 = vld [vmem:[#allocation2 + $0x108] sm:$0xff]
        %v236 = vld [vmem:[#allocation2 + $0x110] sm:$0xff]
        %v237 = vld [vmem:[#allocation2 + $0x118] sm:$0xff]
        %v238 = vld [vmem:[#allocation2 + $0x120] sm:$0xff]
        %v239 = vld [vmem:[#allocation2 + $0x128] sm:$0xff]
        %v240 = vld [vmem:[#allocation2 + $0x130] sm:$0xff]
        %v241 = vld [vmem:[#allocation2 + $0x138] sm:$0xff]
        %v242 = vld [vmem:[#allocation2 + $0x140] sm:$0xff]
        %v243 = vld [vmem:[#allocation2 + $0x148] sm:$0xff]
        %v244 = vld [vmem:[#allocation2 + $0x150] sm:$0xff]
        %v245 = vld [vmem:[#allocation2 + $0x158] sm:$0xff]
        %v246 = vld [vmem:[#allocation2 + $0x160] sm:$0xff]
        %v247 = vld [vmem:[#allocation2 + $0x168] sm:$0xff]
        %v248 = vld [vmem:[#allocation2 + $0x170] sm:$0xff]
        %v249 = vld [vmem:[#allocation2 + $0x178] sm:$0xff]
        %v250 = vld [vmem:[#allocation2 + $0x180] sm:$0x1]
        %v251 = vld [vmem:[#allocation2 + $0x181] sm:$0x1]
        %v252 = vld [vmem:[#allocation2 + $0x182] sm:$0x1]
        %v253 = vlaneseq
        %v254 = vshrl.u32 %v253, 7
        %v255 = vsub.s32 0, %v254
        %v256 = vrot.slane %v250, %v255
        %257 = vmatprep.subr.mxu0 0.0
        %258 = vmatpush1.msra.mxu0 %v217
        %259 = vmatprep.subr.mxu0 0.0
        %260 = vmatpush1.msra.mxu0 %v216
        %261 = vmatprep.subr.mxu0 0.0
        %262 = vmatpush1.msra.mxu0 %v215
        %263 = vmatprep.subr.mxu0 0.0
        %264 = vmatpush1.msra.mxu0 %v214
        %265 = vmatprep.subr.mxu0 0.0
        %266 = vmatpush1.msra.mxu0 %v213
        %267 = vmatprep.subr.mxu0 0.0
        %268 = vmatpush1.msra.mxu0 %v212
        %269 = vmatprep.subr.mxu0 0.0
        %270 = vmatpush1.msra.mxu0 %v211
        %271 = vmatprep.subr.mxu0 0.0
        %272 = vmatpush1.msra.mxu0 %v210
        %273 = vmatprep.subr.mxu0 0.0
        %274 = vmatpush1.msra.mxu0 %v209
        %275 = vmatprep.subr.mxu0 0.0
        %276 = vmatpush1.msra.mxu0 %v208
        %277 = vmatprep.subr.mxu0 0.0
        %278 = vmatpush1.msra.mxu0 %v207
        %279 = vmatprep.subr.mxu0 0.0
        %280 = vmatpush1.msra.mxu0 %v206
        %281 = vmatprep.subr.mxu0 0.0
        %282 = vmatpush1.msra.mxu0 %v205
        %283 = vmatprep.subr.mxu0 0.0
        %284 = vmatpush1.msra.mxu0 %v204
        %285 = vmatprep.subr.mxu0 0.0
        %286 = vmatpush1.msra.mxu0 %v203
        %287 = vmatprep.subr.mxu0 0.0
        %288 = vmatpush1.msra.mxu0 %v202
        %289 = vmatprep.subr.mxu0 0.0
        %290 = vmatpush2.msra.mxu0 0.0
        %291 = vmatprep.subr.mxu0 0.0
        %292 = vmatpush2.msra.mxu0 0.0
        %293 = vmatprep.subr.mxu0 0.0
        %294 = vmatpush2.msra.mxu0 0.0
        %295 = vmatprep.subr.mxu0 0.0
        %296 = vmatpush2.msra.mxu0 0.0
        %297 = vmatprep.subr.mxu0 0.0
        %298 = vmatpush2.msra.mxu0 0.0
        %299 = vmatprep.subr.mxu0 0.0
        %300 = vmatpush2.msra.mxu0 0.0
        %301 = vmatprep.subr.mxu0 0.0
        %302 = vmatpush2.msra.mxu0 0.0
        %303 = vmatprep.subr.mxu0 0.0
        %304 = vmatpush2.msra.mxu0 0.0
        %305 = vmatprep.subr.mxu0 0.0
        %306 = vmatpush2.msra.mxu0 0.0
        %307 = vmatprep.subr.mxu0 0.0
        %308 = vmatpush2.msra.mxu0 0.0
        %309 = vmatprep.subr.mxu0 0.0
        %310 = vmatpush2.msra.mxu0 0.0
        %311 = vmatprep.subr.mxu0 0.0
        %312 = vmatpush2.msra.mxu0 0.0
        %313 = vmatprep.subr.mxu0 0.0
        %314 = vmatpush2.msra.mxu0 0.0
        %315 = vmatprep.subr.mxu0 0.0
        %316 = vmatpush2.msra.mxu0 0.0
        %317 = vmatprep.subr.mxu0 0.0
        %318 = vmatpush2.msra.mxu0 0.0
        %319 = vmatprep.subr.mxu0 0.0
        %320 = vmatpush2.msra.mxu0 0.0
        %321 = vmatprep.mubr.f32.mxu0 0.0
        %322 = vmatmul.mubr.f32.gmra.mxu0 %v201
        %v323 = vpop.f32.mrf.mxu0
        %v324 = vadd.f32 %v256, %v323
        %v325 = vpop.f32.mrf.mxu0
        %326 = vdwg.mxu0
        %v327 = vmax.f32 %v324, 0.0
        %v328 = vlaneseq
        %v329 = vshrl.u32 %v328, 7
        %v330 = vsub.s32 0, %v329
        %v331 = vrot.slane %v251, %v330
        %332 = vmatprep.subr.mxu0 0.0
        %333 = vmatpush1.msra.mxu0 %v233
        %334 = vmatprep.subr.mxu0 0.0
        %335 = vmatpush1.msra.mxu0 %v232
        %336 = vmatprep.subr.mxu0 0.0
        %337 = vmatpush1.msra.mxu0 %v231
        %338 = vmatprep.subr.mxu0 0.0
        %339 = vmatpush1.msra.mxu0 %v230
        %340 = vmatprep.subr.mxu0 0.0
        %341 = vmatpush1.msra.mxu0 %v229
        %342 = vmatprep.subr.mxu0 0.0
        %343 = vmatpush1.msra.mxu0 %v228
        %344 = vmatprep.subr.mxu0 0.0
        %345 = vmatpush1.msra.mxu0 %v227
        %346 = vmatprep.subr.mxu0 0.0
        %347 = vmatpush1.msra.mxu0 %v226
        %348 = vmatprep.subr.mxu0 0.0
        %349 = vmatpush1.msra.mxu0 %v225
        %350 = vmatprep.subr.mxu0 0.0
        %351 = vmatpush1.msra.mxu0 %v224
        %352 = vmatprep.subr.mxu0 0.0
        %353 = vmatpush1.msra.mxu0 %v223
        %354 = vmatprep.subr.mxu0 0.0
        %355 = vmatpush1.msra.mxu0 %v222
        %356 = vmatprep.subr.mxu0 0.0
        %357 = vmatpush1.msra.mxu0 %v221
        %358 = vmatprep.subr.mxu0 0.0
        %359 = vmatpush1.msra.mxu0 %v220
        %360 = vmatprep.subr.mxu0 0.0
        %361 = vmatpush1.msra.mxu0 %v219
        %362 = vmatprep.subr.mxu0 0.0
        %363 = vmatpush1.msra.mxu0 %v218
        %364 = vmatprep.subr.mxu0 0.0
        %365 = vmatpush2.msra.mxu0 0.0
        %366 = vmatprep.subr.mxu0 0.0
        %367 = vmatpush2.msra.mxu0 0.0
        %368 = vmatprep.subr.mxu0 0.0
        %369 = vmatpush2.msra.mxu0 0.0
        %370 = vmatprep.subr.mxu0 0.0
        %371 = vmatpush2.msra.mxu0 0.0
        %372 = vmatprep.subr.mxu0 0.0
        %373 = vmatpush2.msra.mxu0 0.0
        %374 = vmatprep.subr.mxu0 0.0
        %375 = vmatpush2.msra.mxu0 0.0
        %376 = vmatprep.subr.mxu0 0.0
        %377 = vmatpush2.msra.mxu0 0.0
        %378 = vmatprep.subr.mxu0 0.0
        %379 = vmatpush2.msra.mxu0 0.0
        %380 = vmatprep.subr.mxu0 0.0
        %381 = vmatpush2.msra.mxu0 0.0
        %382 = vmatprep.subr.mxu0 0.0
        %383 = vmatpush2.msra.mxu0 0.0
        %384 = vmatprep.subr.mxu0 0.0
        %385 = vmatpush2.msra.mxu0 0.0
        %386 = vmatprep.subr.mxu0 0.0
        %387 = vmatpush2.msra.mxu0 0.0
        %388 = vmatprep.subr.mxu0 0.0
        %389 = vmatpush2.msra.mxu0 0.0
        %390 = vmatprep.subr.mxu0 0.0
        %391 = vmatpush2.msra.mxu0 0.0
        %392 = vmatprep.subr.mxu0 0.0
        %393 = vmatpush2.msra.mxu0 0.0
        %394 = vmatprep.subr.mxu0 0.0
        %395 = vmatpush2.msra.mxu0 0.0
        %396 = vmatprep.mubr.f32.mxu0 0.0
        %397 = vmatmul.mubr.f32.gmra.mxu0 %v327
        %v398 = vpop.f32.mrf.mxu0
        %v399 = vadd.f32 %v331, %v398
        %v400 = vpop.f32.mrf.mxu0
        %401 = vdwg.mxu0
        %v402 = vtanh.pop %v399
        %v403 = vlaneseq
        %v404 = vshrl.u32 %v403, 7
        %v405 = vsub.s32 0, %v404
        %v406 = vrot.slane %v252, %v405
        %407 = vmatprep.subr.mxu0 0.0
        %408 = vmatpush1.msra.mxu0 %v249
        %409 = vmatprep.subr.mxu0 0.0
        %410 = vmatpush1.msra.mxu0 %v248
        %411 = vmatprep.subr.mxu0 0.0
        %412 = vmatpush1.msra.mxu0 %v247
        %413 = vmatprep.subr.mxu0 0.0
        %414 = vmatpush1.msra.mxu0 %v246
        %415 = vmatprep.subr.mxu0 0.0
        %416 = vmatpush1.msra.mxu0 %v245
        %417 = vmatprep.subr.mxu0 0.0
        %418 = vmatpush1.msra.mxu0 %v244
        %419 = vmatprep.subr.mxu0 0.0
        %420 = vmatpush1.msra.mxu0 %v243
        %421 = vmatprep.subr.mxu0 0.0
        %422 = vmatpush1.msra.mxu0 %v242
        %423 = vmatprep.subr.mxu0 0.0
        %424 = vmatpush1.msra.mxu0 %v241
        %425 = vmatprep.subr.mxu0 0.0
        %426 = vmatpush1.msra.mxu0 %v240
        %427 = vmatprep.subr.mxu0 0.0
        %428 = vmatpush1.msra.mxu0 %v239
        %429 = vmatprep.subr.mxu0 0.0
        %430 = vmatpush1.msra.mxu0 %v238
        %431 = vmatprep.subr.mxu0 0.0
        %432 = vmatpush1.msra.mxu0 %v237
        %433 = vmatprep.subr.mxu0 0.0
        %434 = vmatpush1.msra.mxu0 %v236
        %435 = vmatprep.subr.mxu0 0.0
        %436 = vmatpush1.msra.mxu0 %v235
        %437 = vmatprep.subr.mxu0 0.0
        %438 = vmatpush1.msra.mxu0 %v234
        %439 = vmatprep.subr.mxu0 0.0
        %440 = vmatpush2.msra.mxu0 0.0
        %441 = vmatprep.subr.mxu0 0.0
        %442 = vmatpush2.msra.mxu0 0.0
        %443 = vmatprep.subr.mxu0 0.0
        %444 = vmatpush2.msra.mxu0 0.0
        %445 = vmatprep.subr.mxu0 0.0
        %446 = vmatpush2.msra.mxu0 0.0
        %447 = vmatprep.subr.mxu0 0.0
        %448 = vmatpush2.msra.mxu0 0.0
        %449 = vmatprep.subr.mxu0 0.0
        %450 = vmatpush2.msra.mxu0 0.0
        %451 = vmatprep.subr.mxu0 0.0
        %452 = vmatpush2.msra.mxu0 0.0
        %453 = vmatprep.subr.mxu0 0.0
        %454 = vmatpush2.msra.mxu0 0.0
        %455 = vmatprep.subr.mxu0 0.0
        %456 = vmatpush2.msra.mxu0 0.0
        %457 = vmatprep.subr.mxu0 0.0
        %458 = vmatpush2.msra.mxu0 0.0
        %459 = vmatprep.subr.mxu0 0.0
        %460 = vmatpush2.msra.mxu0 0.0
        %461 = vmatprep.subr.mxu0 0.0
        %462 = vmatpush2.msra.mxu0 0.0
        %463 = vmatprep.subr.mxu0 0.0
        %464 = vmatpush2.msra.mxu0 0.0
        %465 = vmatprep.subr.mxu0 0.0
        %466 = vmatpush2.msra.mxu0 0.0
        %467 = vmatprep.subr.mxu0 0.0
        %468 = vmatpush2.msra.mxu0 0.0
        %469 = vmatprep.subr.mxu0 0.0
        %470 = vmatpush2.msra.mxu0 0.0
        %471 = vmatprep.mubr.f32.mxu0 0.0
        %472 = vmatmul.mubr.f32.gmra.mxu0 %v402
        %v473 = vpop.f32.mrf.mxu0
        %v474 = vadd.f32 %v406, %v473
        %v475 = vpop.f32.mrf.mxu0
        %476 = vdwg.mxu0
        %v477 = vmul.f32 %v474, 0.5
        %v478 = vmul.f32 %v477, 1.442695
        %v479 = vpow.pop %v478
        %v480 = vlaneseq
        %v481 = vand.u32 %v480, 127
        %vm482 = vcmp.ge.s32.totalorder %v481, 2
        %vm483 = vcmp.lt.s32.totalorder %v481, 3
        %vm484 = vmand %vm482, %vm483
        %v485 = vsel %vm484, %v479, %v474
        %486 = vst [vmem:[%s189] sm:$0xff] %v485
        %488 = vrot.lane.b32.xlu0 %v479, 126
        %v489 = vpop.permute.xlu0 %488
        %v491 = vmul.f32 %v199, %v489
        %v492 = vadd.f32 %v474, %v491
        %vm493 = vcmask 7168
        %494 = vst.msk [vmem:[%s189] sm:$0xff] %vm493, %v492
        %s495 = sand.u32 %s99, 1
        %s496 = scalar_lea.sflag [#allocation4], %s495
        %s497 = sand.u32 %s99, 1
        %s498 = smul.addr %s497, 8
        %s499 = scalar_lea.vmem [#allocation5], %s498
        // Predicated region
        $region37: #{tpu_custom_call.1} parent=31 // pred_check
          %p500 = pneg %p109
        $region38: #{tpu_custom_call.1} parent=31 // pred_check_branch
          %502 = sbr.rel (%p500) target = $region40
        $region39: #{tpu_custom_call.1} parent=31 // pred_region
          %s504 = ssub.s32 128, 128
          %505 = vsyncadd %s496, %s504
          %s506 = smul.addr %s18, 128
          %s507 = scalar_lea.hbm %s3, %s506
          %s509 = sshll.u32 %s499, 4
          %s510 = int_to_ptr.vmem [resolvable:$true] %s509
          %512 = dma.vmem_to_hbm [thread:$0]  %s510, 128, %s507, %s496
        $region40: #{tpu_custom_call.1} parent=31 // pred_fallthru
          _
      $region32: #{tpu_custom_call.1} parent=5 // pred_fallthru
        _
      %p513 = scmp.le.s32.totalorder 2, %s13
      // Predicated region
      $region41: #{tpu_custom_call.1} parent=5 // pred_check
        %p514 = pneg %p513
      $region42: #{tpu_custom_call.1} parent=5 // pred_check_branch
        %516 = sbr.rel (%p514) target = $region44
      $region43: #{tpu_custom_call.1} parent=5 // pred_region
        %s517 = ssub.s32 %s13, 2
        // Predicated region
        $region45: #{tpu_custom_call.1} parent=43 // pred_check
          %p518 = pneg %p115
        $region46: #{tpu_custom_call.1} parent=43 // pred_check_branch
          %520 = sbr.rel (%p518) target = $region48
        $region47: #{tpu_custom_call.1} parent=43 // pred_region
          %s521 = sand.u32 %s100, 1
          %s522 = scalar_lea.sflag [#allocation4], %s521
          %s523 = sand.u32 %s100, 1
          %s524 = smul.addr %s523, 8
          %s525 = scalar_lea.vmem [#allocation5], %s524
          %526 = dma.done %s522, 128
        $region48: #{tpu_custom_call.1} parent=43 // pred_fallthru
          _
      $region44: #{tpu_custom_call.1} parent=5 // pred_fallthru
        _
    $region6: #{tpu_custom_call.1} parent=1 // loop_footer
      %s17 = sadd.s32 1, %s13
    $region7: #{tpu_custom_call.1} parent=1 // loop_footer_branch
      %12 = sbr.rel target = $region3
    $region8: #{tpu_custom_call.1} parent=1 // loop_exit
      _
    %527 = vsyncpa [#allocation3], 1
    %s528 = scalar_lea.sflag [#allocation3], 1
    %529 = vsyncpa %s528, 1
    %530 = vsyncpa [#allocation4], 1
    %s531 = scalar_lea.sflag [#allocation4], 1
    %532 = vsyncpa %s531, 1

</llo_original>
